<compile_context>
chip_gen: v7x
topology: tpu7x:2x2x1
jax: 0.10.0
libtpu: 0.0.40
codegen_flags: <defaults>
</compile_context>

<pallas_src>
import jax
import jax.numpy as jnp
from jax.experimental import pallas as pl
from jax.experimental.pallas import tpu as pltpu


def _round_up(x, m):
    return ((x + m - 1) // m) * m


# --------------------------------- kernel ------------------------------------

def _class_embed_kernel(ids_ref, table_ref, o_ref, buf, sem):
    # ids_ref   : SMEM (B_pad,) int32   -- scalar-prefetch class ids
    # table_ref : HBM  (n_classes, D)   -- full embedding table (pl.ANY)
    # o_ref     : VMEM (RB, D)          -- output block for this grid step
    # buf       : VMEM (RB, D) scratch  -- gather landing buffer
    # sem       : DMA semaphores (RB,)
    i = pl.program_id(0)
    rb = buf.shape[0]

    # Issue all RB row-gather DMAs back-to-back; their HBM latencies overlap.
    for r in range(rb):                              # static unroll, rb small
        row = ids_ref[i * rb + r]
        pltpu.make_async_copy(
            table_ref.at[pl.ds(row, 1)], buf.at[pl.ds(r, 1)], sem.at[r]
        ).start()
    for r in range(rb):
        pltpu.make_async_copy(
            table_ref.at[pl.ds(0, 1)], buf.at[pl.ds(r, 1)], sem.at[r]
        ).wait()

    # One dense (RB, D) store — full unmasked tiles once RB >= sublane height.
    o_ref[...] = buf[...]


# --------------------------------- wrapper -----------------------------------

def class_embedder_forward(batch, embedding_table, key="class"):
    """JAX/Pallas equivalent of ClassEmbedder.forward.

    batch[key] : (B,) integer class ids.
    Returns (B, 1, embed_dim) with the embedding table's dtype.
    """
    # TODO(synk): dict-key selection (batch[self.key]) is host-side Python
    # glue, not a TPU op; it is done here in the wrapper.
    class_ids = jnp.asarray(batch[key])
    n_classes, d = embedding_table.shape
    b = class_ids.shape[0]

    # Clamp ids (bounds insurance for the gather DMAs).
    class_ids = jnp.clip(class_ids.astype(jnp.int32), 0, n_classes - 1)

    # Rows gathered per grid step: at least one packed sublane-tile height for
    # the table dtype (8 f32 / 16 bf16 / 32 int8), capped so very large
    # batches still split into a few megacore-shardable steps.
    itemsize = embedding_table.dtype.itemsize
    sub = max(8, 32 // itemsize)
    rb = min(_round_up(b, sub), 8 * sub)
    b_pad = _round_up(b, rb)
    if b_pad != b:
        class_ids = jnp.pad(class_ids, (0, b_pad - b))   # pad rows gather row 0

    grid_spec = pltpu.PrefetchScalarGridSpec(
        num_scalar_prefetch=1,                          # ids land in SMEM
        grid=(b_pad // rb,),
        in_specs=[pl.BlockSpec(memory_space=pl.ANY)],   # table stays in HBM
        out_specs=pl.BlockSpec((rb, d), lambda i, ids: (i, 0)),
        scratch_shapes=[
            pltpu.VMEM((rb, d), embedding_table.dtype),
            pltpu.SemaphoreType.DMA((rb,)),
        ],
    )

    out = pl.pallas_call(
        _class_embed_kernel,
        out_shape=jax.ShapeDtypeStruct((b_pad, d), embedding_table.dtype),
        grid_spec=grid_spec,
        compiler_params=pltpu.CompilerParams(
            # Steps are independent (each gathers + stores only its own rows),
            # so the batch axis may shard across v7x's two TensorCores.
            dimension_semantics=("parallel",),
        ),
    )(class_ids, embedding_table)

    # Un-pad and add the length-1 middle axis (free layout glue).
    return out[:b][:, None, :]


# ----------------------------------- main ------------------------------------

if __name__ == "__main__":
    # small, module-consistent config (nn.Embedding(n_classes, embed_dim))
    embed_dim = 128        # lane-dense last dim (full 128-lane vreg width)
    n_classes = 1000
    B = 4

    rng = jax.random.PRNGKey(0)
    wkey, ckey = jax.random.split(rng)
    # nn.Embedding default init ~ N(0, 1)
    embedding_table = jax.random.normal(wkey, (n_classes, embed_dim), jnp.float32)
    class_ids = jax.random.randint(ckey, (B,), 0, n_classes, dtype=jnp.int32)
    batch = {"class": class_ids}

    c = class_embedder_forward(batch, embedding_table)
    c = jax.block_until_ready(c)

    # reference check against plain-JAX embedding lookup
    ref = embedding_table[class_ids][:, None, :]
    assert c.shape == (B, 1, embed_dim) and c.dtype == jnp.float32
    assert jnp.allclose(c, ref)
    print("KERNEL_OK")
</pallas_src>

<mosaic_0001>
module attributes {stable_mosaic.version = 11 : i64} {
  func.func @_class_embed_kernel(%arg0: i32, %arg1: memref<8xi32, #tpu.memory_space<smem>>, %arg2: memref<1000x128xf32, #tpu.memory_space<any>>, %arg3: memref<8x128xf32, #tpu.memory_space<vmem>>, %arg4: memref<8x128xf32, #tpu.memory_space<vmem>>, %arg5: memref<8x!tpu.dma_semaphore, #tpu.memory_space<semaphore_mem>>) attributes {dimension_semantics = [#tpu.dimension_semantics<parallel>], iteration_bounds = array<i64: 1>, scalar_prefetch = 1 : i64, scratch_operands = 2 : i64, tpu.core_type = #tpu.core_type<tc>, window_params = [{}, {transform_indices = @transform_1, window_bounds = array<i64: 8, 128>}]} {
    %c8_i32 = arith.constant 8 : i32
    %0 = arith.muli %arg0, %c8_i32 : i32
    %c0_i32 = arith.constant 0 : i32
    %1 = arith.addi %0, %c0_i32 : i32
    %2 = arith.index_cast %1 : i32 to index
    %3 = memref.load %arg1[%2] : memref<8xi32, #tpu.memory_space<smem>>
    %c0_i32_0 = arith.constant 0 : i32
    %c0_i32_1 = arith.constant 0 : i32
    %4 = tpu.memref_slice %arg2[%3, %c0_i32_1] : memref<1000x128xf32, #tpu.memory_space<any>> -> memref<1x128xf32, #tpu.memory_space<any>>
    %c0_i32_2 = arith.constant 0 : i32
    %c0_i32_3 = arith.constant 0 : i32
    %5 = tpu.memref_slice %arg4[%c0_i32_2, %c0_i32_3] : memref<8x128xf32, #tpu.memory_space<vmem>> -> memref<1x128xf32, #tpu.memory_space<vmem>>
    %6 = tpu.memref_slice %arg5[%c0_i32_0] : memref<8x!tpu.dma_semaphore, #tpu.memory_space<semaphore_mem>> -> memref<1x!tpu.dma_semaphore, #tpu.memory_space<semaphore_mem>>
    %7 = tpu.memref_squeeze %6 : memref<1x!tpu.dma_semaphore, #tpu.memory_space<semaphore_mem>> -> memref<!tpu.dma_semaphore, #tpu.memory_space<semaphore_mem>>
    tpu.enqueue_dma source(%4 : memref<1x128xf32, #tpu.memory_space<any>>) target(%5 : memref<1x128xf32, #tpu.memory_space<vmem>>) target_semaphore(%7 : memref<!tpu.dma_semaphore, #tpu.memory_space<semaphore_mem>>)
    %c8_i32_4 = arith.constant 8 : i32
    %8 = arith.muli %arg0, %c8_i32_4 : i32
    %c1_i32 = arith.constant 1 : i32
    %9 = arith.addi %8, %c1_i32 : i32
    %10 = arith.index_cast %9 : i32 to index
    %11 = memref.load %arg1[%10] : memref<8xi32, #tpu.memory_space<smem>>
    %c1_i32_5 = arith.constant 1 : i32
    %c0_i32_6 = arith.constant 0 : i32
    %12 = tpu.memref_slice %arg2[%11, %c0_i32_6] : memref<1000x128xf32, #tpu.memory_space<any>> -> memref<1x128xf32, #tpu.memory_space<any>>
    %c1_i32_7 = arith.constant 1 : i32
    %c0_i32_8 = arith.constant 0 : i32
    %13 = tpu.memref_slice %arg4[%c1_i32_7, %c0_i32_8] : memref<8x128xf32, #tpu.memory_space<vmem>> -> memref<1x128xf32, #tpu.memory_space<vmem>>
    %14 = tpu.memref_slice %arg5[%c1_i32_5] : memref<8x!tpu.dma_semaphore, #tpu.memory_space<semaphore_mem>> -> memref<1x!tpu.dma_semaphore, #tpu.memory_space<semaphore_mem>>
    %15 = tpu.memref_squeeze %14 : memref<1x!tpu.dma_semaphore, #tpu.memory_space<semaphore_mem>> -> memref<!tpu.dma_semaphore, #tpu.memory_space<semaphore_mem>>
    tpu.enqueue_dma source(%12 : memref<1x128xf32, #tpu.memory_space<any>>) target(%13 : memref<1x128xf32, #tpu.memory_space<vmem>>) target_semaphore(%15 : memref<!tpu.dma_semaphore, #tpu.memory_space<semaphore_mem>>)
    %c8_i32_9 = arith.constant 8 : i32
    %16 = arith.muli %arg0, %c8_i32_9 : i32
    %c2_i32 = arith.constant 2 : i32
    %17 = arith.addi %16, %c2_i32 : i32
    %18 = arith.index_cast %17 : i32 to index
    %19 = memref.load %arg1[%18] : memref<8xi32, #tpu.memory_space<smem>>
    %c2_i32_10 = arith.constant 2 : i32
    %c0_i32_11 = arith.constant 0 : i32
    %20 = tpu.memref_slice %arg2[%19, %c0_i32_11] : memref<1000x128xf32, #tpu.memory_space<any>> -> memref<1x128xf32, #tpu.memory_space<any>>
    %c2_i32_12 = arith.constant 2 : i32
    %c0_i32_13 = arith.constant 0 : i32
    %21 = tpu.memref_slice %arg4[%c2_i32_12, %c0_i32_13] : memref<8x128xf32, #tpu.memory_space<vmem>> -> memref<1x128xf32, #tpu.memory_space<vmem>>
    %22 = tpu.memref_slice %arg5[%c2_i32_10] : memref<8x!tpu.dma_semaphore, #tpu.memory_space<semaphore_mem>> -> memref<1x!tpu.dma_semaphore, #tpu.memory_space<semaphore_mem>>
    %23 = tpu.memref_squeeze %22 : memref<1x!tpu.dma_semaphore, #tpu.memory_space<semaphore_mem>> -> memref<!tpu.dma_semaphore, #tpu.memory_space<semaphore_mem>>
    tpu.enqueue_dma source(%20 : memref<1x128xf32, #tpu.memory_space<any>>) target(%21 : memref<1x128xf32, #tpu.memory_space<vmem>>) target_semaphore(%23 : memref<!tpu.dma_semaphore, #tpu.memory_space<semaphore_mem>>)
    %c8_i32_14 = arith.constant 8 : i32
    %24 = arith.muli %arg0, %c8_i32_14 : i32
    %c3_i32 = arith.constant 3 : i32
    %25 = arith.addi %24, %c3_i32 : i32
    %26 = arith.index_cast %25 : i32 to index
    %27 = memref.load %arg1[%26] : memref<8xi32, #tpu.memory_space<smem>>
    %c3_i32_15 = arith.constant 3 : i32
    %c0_i32_16 = arith.constant 0 : i32
    %28 = tpu.memref_slice %arg2[%27, %c0_i32_16] : memref<1000x128xf32, #tpu.memory_space<any>> -> memref<1x128xf32, #tpu.memory_space<any>>
    %c3_i32_17 = arith.constant 3 : i32
    %c0_i32_18 = arith.constant 0 : i32
    %29 = tpu.memref_slice %arg4[%c3_i32_17, %c0_i32_18] : memref<8x128xf32, #tpu.memory_space<vmem>> -> memref<1x128xf32, #tpu.memory_space<vmem>>
    %30 = tpu.memref_slice %arg5[%c3_i32_15] : memref<8x!tpu.dma_semaphore, #tpu.memory_space<semaphore_mem>> -> memref<1x!tpu.dma_semaphore, #tpu.memory_space<semaphore_mem>>
    %31 = tpu.memref_squeeze %30 : memref<1x!tpu.dma_semaphore, #tpu.memory_space<semaphore_mem>> -> memref<!tpu.dma_semaphore, #tpu.memory_space<semaphore_mem>>
    tpu.enqueue_dma source(%28 : memref<1x128xf32, #tpu.memory_space<any>>) target(%29 : memref<1x128xf32, #tpu.memory_space<vmem>>) target_semaphore(%31 : memref<!tpu.dma_semaphore, #tpu.memory_space<semaphore_mem>>)
    %c8_i32_19 = arith.constant 8 : i32
    %32 = arith.muli %arg0, %c8_i32_19 : i32
    %c4_i32 = arith.constant 4 : i32
    %33 = arith.addi %32, %c4_i32 : i32
    %34 = arith.index_cast %33 : i32 to index
    %35 = memref.load %arg1[%34] : memref<8xi32, #tpu.memory_space<smem>>
    %c4_i32_20 = arith.constant 4 : i32
    %c0_i32_21 = arith.constant 0 : i32
    %36 = tpu.memref_slice %arg2[%35, %c0_i32_21] : memref<1000x128xf32, #tpu.memory_space<any>> -> memref<1x128xf32, #tpu.memory_space<any>>
    %c4_i32_22 = arith.constant 4 : i32
    %c0_i32_23 = arith.constant 0 : i32
    %37 = tpu.memref_slice %arg4[%c4_i32_22, %c0_i32_23] : memref<8x128xf32, #tpu.memory_space<vmem>> -> memref<1x128xf32, #tpu.memory_space<vmem>>
    %38 = tpu.memref_slice %arg5[%c4_i32_20] : memref<8x!tpu.dma_semaphore, #tpu.memory_space<semaphore_mem>> -> memref<1x!tpu.dma_semaphore, #tpu.memory_space<semaphore_mem>>
    %39 = tpu.memref_squeeze %38 : memref<1x!tpu.dma_semaphore, #tpu.memory_space<semaphore_mem>> -> memref<!tpu.dma_semaphore, #tpu.memory_space<semaphore_mem>>
    tpu.enqueue_dma source(%36 : memref<1x128xf32, #tpu.memory_space<any>>) target(%37 : memref<1x128xf32, #tpu.memory_space<vmem>>) target_semaphore(%39 : memref<!tpu.dma_semaphore, #tpu.memory_space<semaphore_mem>>)
    %c8_i32_24 = arith.constant 8 : i32
    %40 = arith.muli %arg0, %c8_i32_24 : i32
    %c5_i32 = arith.constant 5 : i32
    %41 = arith.addi %40, %c5_i32 : i32
    %42 = arith.index_cast %41 : i32 to index
    %43 = memref.load %arg1[%42] : memref<8xi32, #tpu.memory_space<smem>>
    %c5_i32_25 = arith.constant 5 : i32
    %c0_i32_26 = arith.constant 0 : i32
    %44 = tpu.memref_slice %arg2[%43, %c0_i32_26] : memref<1000x128xf32, #tpu.memory_space<any>> -> memref<1x128xf32, #tpu.memory_space<any>>
    %c5_i32_27 = arith.constant 5 : i32
    %c0_i32_28 = arith.constant 0 : i32
    %45 = tpu.memref_slice %arg4[%c5_i32_27, %c0_i32_28] : memref<8x128xf32, #tpu.memory_space<vmem>> -> memref<1x128xf32, #tpu.memory_space<vmem>>
    %46 = tpu.memref_slice %arg5[%c5_i32_25] : memref<8x!tpu.dma_semaphore, #tpu.memory_space<semaphore_mem>> -> memref<1x!tpu.dma_semaphore, #tpu.memory_space<semaphore_mem>>
    %47 = tpu.memref_squeeze %46 : memref<1x!tpu.dma_semaphore, #tpu.memory_space<semaphore_mem>> -> memref<!tpu.dma_semaphore, #tpu.memory_space<semaphore_mem>>
    tpu.enqueue_dma source(%44 : memref<1x128xf32, #tpu.memory_space<any>>) target(%45 : memref<1x128xf32, #tpu.memory_space<vmem>>) target_semaphore(%47 : memref<!tpu.dma_semaphore, #tpu.memory_space<semaphore_mem>>)
    %c8_i32_29 = arith.constant 8 : i32
    %48 = arith.muli %arg0, %c8_i32_29 : i32
    %c6_i32 = arith.constant 6 : i32
    %49 = arith.addi %48, %c6_i32 : i32
    %50 = arith.index_cast %49 : i32 to index
    %51 = memref.load %arg1[%50] : memref<8xi32, #tpu.memory_space<smem>>
    %c6_i32_30 = arith.constant 6 : i32
    %c0_i32_31 = arith.constant 0 : i32
    %52 = tpu.memref_slice %arg2[%51, %c0_i32_31] : memref<1000x128xf32, #tpu.memory_space<any>> -> memref<1x128xf32, #tpu.memory_space<any>>
    %c6_i32_32 = arith.constant 6 : i32
    %c0_i32_33 = arith.constant 0 : i32
    %53 = tpu.memref_slice %arg4[%c6_i32_32, %c0_i32_33] : memref<8x128xf32, #tpu.memory_space<vmem>> -> memref<1x128xf32, #tpu.memory_space<vmem>>
    %54 = tpu.memref_slice %arg5[%c6_i32_30] : memref<8x!tpu.dma_semaphore, #tpu.memory_space<semaphore_mem>> -> memref<1x!tpu.dma_semaphore, #tpu.memory_space<semaphore_mem>>
    %55 = tpu.memref_squeeze %54 : memref<1x!tpu.dma_semaphore, #tpu.memory_space<semaphore_mem>> -> memref<!tpu.dma_semaphore, #tpu.memory_space<semaphore_mem>>
    tpu.enqueue_dma source(%52 : memref<1x128xf32, #tpu.memory_space<any>>) target(%53 : memref<1x128xf32, #tpu.memory_space<vmem>>) target_semaphore(%55 : memref<!tpu.dma_semaphore, #tpu.memory_space<semaphore_mem>>)
    %c8_i32_34 = arith.constant 8 : i32
    %56 = arith.muli %arg0, %c8_i32_34 : i32
    %c7_i32 = arith.constant 7 : i32
    %57 = arith.addi %56, %c7_i32 : i32
    %58 = arith.index_cast %57 : i32 to index
    %59 = memref.load %arg1[%58] : memref<8xi32, #tpu.memory_space<smem>>
    %c7_i32_35 = arith.constant 7 : i32
    %c0_i32_36 = arith.constant 0 : i32
    %60 = tpu.memref_slice %arg2[%59, %c0_i32_36] : memref<1000x128xf32, #tpu.memory_space<any>> -> memref<1x128xf32, #tpu.memory_space<any>>
    %c7_i32_37 = arith.constant 7 : i32
    %c0_i32_38 = arith.constant 0 : i32
    %61 = tpu.memref_slice %arg4[%c7_i32_37, %c0_i32_38] : memref<8x128xf32, #tpu.memory_space<vmem>> -> memref<1x128xf32, #tpu.memory_space<vmem>>
    %62 = tpu.memref_slice %arg5[%c7_i32_35] : memref<8x!tpu.dma_semaphore, #tpu.memory_space<semaphore_mem>> -> memref<1x!tpu.dma_semaphore, #tpu.memory_space<semaphore_mem>>
    %63 = tpu.memref_squeeze %62 : memref<1x!tpu.dma_semaphore, #tpu.memory_space<semaphore_mem>> -> memref<!tpu.dma_semaphore, #tpu.memory_space<semaphore_mem>>
    tpu.enqueue_dma source(%60 : memref<1x128xf32, #tpu.memory_space<any>>) target(%61 : memref<1x128xf32, #tpu.memory_space<vmem>>) target_semaphore(%63 : memref<!tpu.dma_semaphore, #tpu.memory_space<semaphore_mem>>)
    %c0_i32_39 = arith.constant 0 : i32
    %c0_i32_40 = arith.constant 0 : i32
    %c0_i32_41 = arith.constant 0 : i32
    %64 = tpu.memref_slice %arg2[%c0_i32_40, %c0_i32_41] : memref<1000x128xf32, #tpu.memory_space<any>> -> memref<1x128xf32, #tpu.memory_space<any>>
    %c0_i32_42 = arith.constant 0 : i32
    %c0_i32_43 = arith.constant 0 : i32
    %65 = tpu.memref_slice %arg4[%c0_i32_42, %c0_i32_43] : memref<8x128xf32, #tpu.memory_space<vmem>> -> memref<1x128xf32, #tpu.memory_space<vmem>>
    %66 = tpu.memref_slice %arg5[%c0_i32_39] : memref<8x!tpu.dma_semaphore, #tpu.memory_space<semaphore_mem>> -> memref<1x!tpu.dma_semaphore, #tpu.memory_space<semaphore_mem>>
    %67 = tpu.memref_squeeze %66 : memref<1x!tpu.dma_semaphore, #tpu.memory_space<semaphore_mem>> -> memref<!tpu.dma_semaphore, #tpu.memory_space<semaphore_mem>>
    tpu.wait_dma2 semaphore(%67 : memref<!tpu.dma_semaphore, #tpu.memory_space<semaphore_mem>>) src(%64 : memref<1x128xf32, #tpu.memory_space<any>>) dst(%65 : memref<1x128xf32, #tpu.memory_space<vmem>>)
    %c1_i32_44 = arith.constant 1 : i32
    %c0_i32_45 = arith.constant 0 : i32
    %c0_i32_46 = arith.constant 0 : i32
    %68 = tpu.memref_slice %arg2[%c0_i32_45, %c0_i32_46] : memref<1000x128xf32, #tpu.memory_space<any>> -> memref<1x128xf32, #tpu.memory_space<any>>
    %c1_i32_47 = arith.constant 1 : i32
    %c0_i32_48 = arith.constant 0 : i32
    %69 = tpu.memref_slice %arg4[%c1_i32_47, %c0_i32_48] : memref<8x128xf32, #tpu.memory_space<vmem>> -> memref<1x128xf32, #tpu.memory_space<vmem>>
    %70 = tpu.memref_slice %arg5[%c1_i32_44] : memref<8x!tpu.dma_semaphore, #tpu.memory_space<semaphore_mem>> -> memref<1x!tpu.dma_semaphore, #tpu.memory_space<semaphore_mem>>
    %71 = tpu.memref_squeeze %70 : memref<1x!tpu.dma_semaphore, #tpu.memory_space<semaphore_mem>> -> memref<!tpu.dma_semaphore, #tpu.memory_space<semaphore_mem>>
    tpu.wait_dma2 semaphore(%71 : memref<!tpu.dma_semaphore, #tpu.memory_space<semaphore_mem>>) src(%68 : memref<1x128xf32, #tpu.memory_space<any>>) dst(%69 : memref<1x128xf32, #tpu.memory_space<vmem>>)
    %c2_i32_49 = arith.constant 2 : i32
    %c0_i32_50 = arith.constant 0 : i32
    %c0_i32_51 = arith.constant 0 : i32
    %72 = tpu.memref_slice %arg2[%c0_i32_50, %c0_i32_51] : memref<1000x128xf32, #tpu.memory_space<any>> -> memref<1x128xf32, #tpu.memory_space<any>>
    %c2_i32_52 = arith.constant 2 : i32
    %c0_i32_53 = arith.constant 0 : i32
    %73 = tpu.memref_slice %arg4[%c2_i32_52, %c0_i32_53] : memref<8x128xf32, #tpu.memory_space<vmem>> -> memref<1x128xf32, #tpu.memory_space<vmem>>
    %74 = tpu.memref_slice %arg5[%c2_i32_49] : memref<8x!tpu.dma_semaphore, #tpu.memory_space<semaphore_mem>> -> memref<1x!tpu.dma_semaphore, #tpu.memory_space<semaphore_mem>>
    %75 = tpu.memref_squeeze %74 : memref<1x!tpu.dma_semaphore, #tpu.memory_space<semaphore_mem>> -> memref<!tpu.dma_semaphore, #tpu.memory_space<semaphore_mem>>
    tpu.wait_dma2 semaphore(%75 : memref<!tpu.dma_semaphore, #tpu.memory_space<semaphore_mem>>) src(%72 : memref<1x128xf32, #tpu.memory_space<any>>) dst(%73 : memref<1x128xf32, #tpu.memory_space<vmem>>)
    %c3_i32_54 = arith.constant 3 : i32
    %c0_i32_55 = arith.constant 0 : i32
    %c0_i32_56 = arith.constant 0 : i32
    %76 = tpu.memref_slice %arg2[%c0_i32_55, %c0_i32_56] : memref<1000x128xf32, #tpu.memory_space<any>> -> memref<1x128xf32, #tpu.memory_space<any>>
    %c3_i32_57 = arith.constant 3 : i32
    %c0_i32_58 = arith.constant 0 : i32
    %77 = tpu.memref_slice %arg4[%c3_i32_57, %c0_i32_58] : memref<8x128xf32, #tpu.memory_space<vmem>> -> memref<1x128xf32, #tpu.memory_space<vmem>>
    %78 = tpu.memref_slice %arg5[%c3_i32_54] : memref<8x!tpu.dma_semaphore, #tpu.memory_space<semaphore_mem>> -> memref<1x!tpu.dma_semaphore, #tpu.memory_space<semaphore_mem>>
    %79 = tpu.memref_squeeze %78 : memref<1x!tpu.dma_semaphore, #tpu.memory_space<semaphore_mem>> -> memref<!tpu.dma_semaphore, #tpu.memory_space<semaphore_mem>>
    tpu.wait_dma2 semaphore(%79 : memref<!tpu.dma_semaphore, #tpu.memory_space<semaphore_mem>>) src(%76 : memref<1x128xf32, #tpu.memory_space<any>>) dst(%77 : memref<1x128xf32, #tpu.memory_space<vmem>>)
    %c4_i32_59 = arith.constant 4 : i32
    %c0_i32_60 = arith.constant 0 : i32
    %c0_i32_61 = arith.constant 0 : i32
    %80 = tpu.memref_slice %arg2[%c0_i32_60, %c0_i32_61] : memref<1000x128xf32, #tpu.memory_space<any>> -> memref<1x128xf32, #tpu.memory_space<any>>
    %c4_i32_62 = arith.constant 4 : i32
    %c0_i32_63 = arith.constant 0 : i32
    %81 = tpu.memref_slice %arg4[%c4_i32_62, %c0_i32_63] : memref<8x128xf32, #tpu.memory_space<vmem>> -> memref<1x128xf32, #tpu.memory_space<vmem>>
    %82 = tpu.memref_slice %arg5[%c4_i32_59] : memref<8x!tpu.dma_semaphore, #tpu.memory_space<semaphore_mem>> -> memref<1x!tpu.dma_semaphore, #tpu.memory_space<semaphore_mem>>
    %83 = tpu.memref_squeeze %82 : memref<1x!tpu.dma_semaphore, #tpu.memory_space<semaphore_mem>> -> memref<!tpu.dma_semaphore, #tpu.memory_space<semaphore_mem>>
    tpu.wait_dma2 semaphore(%83 : memref<!tpu.dma_semaphore, #tpu.memory_space<semaphore_mem>>) src(%80 : memref<1x128xf32, #tpu.memory_space<any>>) dst(%81 : memref<1x128xf32, #tpu.memory_space<vmem>>)
    %c5_i32_64 = arith.constant 5 : i32
    %c0_i32_65 = arith.constant 0 : i32
    %c0_i32_66 = arith.constant 0 : i32
    %84 = tpu.memref_slice %arg2[%c0_i32_65, %c0_i32_66] : memref<1000x128xf32, #tpu.memory_space<any>> -> memref<1x128xf32, #tpu.memory_space<any>>
    %c5_i32_67 = arith.constant 5 : i32
    %c0_i32_68 = arith.constant 0 : i32
    %85 = tpu.memref_slice %arg4[%c5_i32_67, %c0_i32_68] : memref<8x128xf32, #tpu.memory_space<vmem>> -> memref<1x128xf32, #tpu.memory_space<vmem>>
    %86 = tpu.memref_slice %arg5[%c5_i32_64] : memref<8x!tpu.dma_semaphore, #tpu.memory_space<semaphore_mem>> -> memref<1x!tpu.dma_semaphore, #tpu.memory_space<semaphore_mem>>
    %87 = tpu.memref_squeeze %86 : memref<1x!tpu.dma_semaphore, #tpu.memory_space<semaphore_mem>> -> memref<!tpu.dma_semaphore, #tpu.memory_space<semaphore_mem>>
    tpu.wait_dma2 semaphore(%87 : memref<!tpu.dma_semaphore, #tpu.memory_space<semaphore_mem>>) src(%84 : memref<1x128xf32, #tpu.memory_space<any>>) dst(%85 : memref<1x128xf32, #tpu.memory_space<vmem>>)
    %c6_i32_69 = arith.constant 6 : i32
    %c0_i32_70 = arith.constant 0 : i32
    %c0_i32_71 = arith.constant 0 : i32
    %88 = tpu.memref_slice %arg2[%c0_i32_70, %c0_i32_71] : memref<1000x128xf32, #tpu.memory_space<any>> -> memref<1x128xf32, #tpu.memory_space<any>>
    %c6_i32_72 = arith.constant 6 : i32
    %c0_i32_73 = arith.constant 0 : i32
    %89 = tpu.memref_slice %arg4[%c6_i32_72, %c0_i32_73] : memref<8x128xf32, #tpu.memory_space<vmem>> -> memref<1x128xf32, #tpu.memory_space<vmem>>
    %90 = tpu.memref_slice %arg5[%c6_i32_69] : memref<8x!tpu.dma_semaphore, #tpu.memory_space<semaphore_mem>> -> memref<1x!tpu.dma_semaphore, #tpu.memory_space<semaphore_mem>>
    %91 = tpu.memref_squeeze %90 : memref<1x!tpu.dma_semaphore, #tpu.memory_space<semaphore_mem>> -> memref<!tpu.dma_semaphore, #tpu.memory_space<semaphore_mem>>
    tpu.wait_dma2 semaphore(%91 : memref<!tpu.dma_semaphore, #tpu.memory_space<semaphore_mem>>) src(%88 : memref<1x128xf32, #tpu.memory_space<any>>) dst(%89 : memref<1x128xf32, #tpu.memory_space<vmem>>)
    %c7_i32_74 = arith.constant 7 : i32
    %c0_i32_75 = arith.constant 0 : i32
    %c0_i32_76 = arith.constant 0 : i32
    %92 = tpu.memref_slice %arg2[%c0_i32_75, %c0_i32_76] : memref<1000x128xf32, #tpu.memory_space<any>> -> memref<1x128xf32, #tpu.memory_space<any>>
    %c7_i32_77 = arith.constant 7 : i32
    %c0_i32_78 = arith.constant 0 : i32
    %93 = tpu.memref_slice %arg4[%c7_i32_77, %c0_i32_78] : memref<8x128xf32, #tpu.memory_space<vmem>> -> memref<1x128xf32, #tpu.memory_space<vmem>>
    %94 = tpu.memref_slice %arg5[%c7_i32_74] : memref<8x!tpu.dma_semaphore, #tpu.memory_space<semaphore_mem>> -> memref<1x!tpu.dma_semaphore, #tpu.memory_space<semaphore_mem>>
    %95 = tpu.memref_squeeze %94 : memref<1x!tpu.dma_semaphore, #tpu.memory_space<semaphore_mem>> -> memref<!tpu.dma_semaphore, #tpu.memory_space<semaphore_mem>>
    tpu.wait_dma2 semaphore(%95 : memref<!tpu.dma_semaphore, #tpu.memory_space<semaphore_mem>>) src(%92 : memref<1x128xf32, #tpu.memory_space<any>>) dst(%93 : memref<1x128xf32, #tpu.memory_space<vmem>>)
    %c0 = arith.constant 0 : index
    %c0_79 = arith.constant 0 : index
    %96 = vector.load %arg4[%c0, %c0_79] : memref<8x128xf32, #tpu.memory_space<vmem>>, vector<8x128xf32>
    %c0_80 = arith.constant 0 : index
    %c0_81 = arith.constant 0 : index
    %97 = vector.load %arg3[%c0_80, %c0_81] : memref<8x128xf32, #tpu.memory_space<vmem>>, vector<8x128xf32>
    tpu.vector_store %arg3[%c0_80, %c0_81], %96 {strides = array<i32>} : memref<8x128xf32, #tpu.memory_space<vmem>>, vector<8x128xf32>,
    return
  }
  func.func @transform_1(%arg0: i32, %arg1: memref<8xi32, #tpu.memory_space<smem>>) -> (i32, i32) {
    %c0_i32 = arith.constant 0 : i32
    %c0_i32_0 = arith.constant 0 : i32
    return %arg0, %c0_i32 : i32, i32
  }
}

</mosaic_0001>

<llo_original>
// kernel: tpu_custom_call.1
$region0: #{tpu_custom_call.1}
  #allocation0 [shape = 'u32[]', space=smem, size = 0x4, offset = 0x4, fixed_abs, tag = 'smem constant byte address 0x4 - core index']
  #allocation1 [shape = 'u32[144,128]{1,0:T(1,128)}', space=vmem, size = 0x12000, scoped, tag = 'internal scratch']
  #allocation2 [shape = 'f32[8,128]{1,0:T(8,128)}', space=vmem, size = 0x1000, scoped, tag = 'scratch operand']
  #allocation3 [shape = 's32[8]{0}', space=sflag, size = 0x20, scoped, tag = 'scratch operand']
  #allocation4 [shape = 's32[1]{0}', space=sflag, size = 0x4, scoped, tag = 'scoped memory for tpu_custom_call.1']
  #allocation5 [shape = 'u8[512]{0}', space=smem, size = 0x200, scoped, tag = 'prefetched SMEM operand 0']
  #allocation8 [shape = 's32[]', space=sflag, size = 0x4, offset = 0, fixed_abs, tag = 'sflag constant byte address 0x0 - dummy sync flag']
  #allocation9 [shape = 's32[]', space=sflag, size = 0x4, offset = 0, fixed_abs, tag = 'sflag constant byte address 0x0 - dummy sync flag']
  #allocation10 [shape = 'u32[]', space=smem, size = 0x4, offset = 0x44, fixed_abs, tag = 'smem constant byte address 0x44 - assertion arg 0']
  #allocation11 [shape = 'u32[]', space=smem, size = 0x4, offset = 0x48, fixed_abs, tag = 'smem constant byte address 0x48 - assertion arg 1']
  #allocation12 [shape = 's32[]', space=sflag, size = 0x4, offset = 0, fixed_abs, tag = 'sflag constant byte address 0x0 - dummy sync flag']
  #allocation13 [shape = 's32[]', space=sflag, size = 0x4, offset = 0, fixed_abs, tag = 'sflag constant byte address 0x0 - dummy sync flag']
  #allocation14 [shape = 's32[]', space=sflag, size = 0x4, offset = 0, fixed_abs, tag = 'sflag constant byte address 0x0 - dummy sync flag']
  #allocation15 [shape = 's32[]', space=sflag, size = 0x4, offset = 0, fixed_abs, tag = 'sflag constant byte address 0x0 - dummy sync flag']
  #allocation16 [shape = 's32[]', space=sflag, size = 0x4, offset = 0, fixed_abs, tag = 'sflag constant byte address 0x0 - dummy sync flag']
  #allocation17 [shape = 's32[]', space=sflag, size = 0x4, offset = 0, fixed_abs, tag = 'sflag constant byte address 0x0 - dummy sync flag']
  #allocation18 [shape = 's32[]', space=sflag, size = 0x4, offset = 0, fixed_abs, tag = 'sflag constant byte address 0x0 - dummy sync flag']
  #allocation19 [shape = 's32[]', space=sflag, size = 0x4, offset = 0, fixed_abs, tag = 'sflag constant byte address 0x0 - dummy sync flag']
  #allocation20 [shape = 's32[]', space=sflag, size = 0x4, offset = 0, fixed_abs, tag = 'sflag constant byte address 0x0 - dummy sync flag']
  #allocation21 [shape = 's32[]', space=sflag, size = 0x4, offset = 0, fixed_abs, tag = 'sflag constant byte address 0x0 - dummy sync flag']
  #allocation22 [shape = 's32[]', space=sflag, size = 0x4, offset = 0, fixed_abs, tag = 'sflag constant byte address 0x0 - dummy sync flag']
  #allocation23 [shape = 's32[]', space=sflag, size = 0x4, offset = 0, fixed_abs, tag = 'sflag constant byte address 0x0 - dummy sync flag']
  #allocation24 [shape = 's32[]', space=sflag, size = 0x4, offset = 0, fixed_abs, tag = 'sflag constant byte address 0x0 - dummy sync flag']
  #allocation25 [shape = 's32[]', space=sflag, size = 0x4, offset = 0, fixed_abs, tag = 'sflag constant byte address 0x0 - dummy sync flag']
  %s0 = inlined_call_operand.hbm [shape: s32[8], index: 0, kind: input, shape index: {}]
  %s1 = inlined_call_operand.hbm [shape: f32[1000,128], index: 1, kind: input, shape index: {}]
  %s2 = inlined_call_operand.hbm [shape: f32[8,128], index: 2, kind: output, shape index: {}]
  %s3 = sld [smem:[#allocation0]]
  $region42: #{tpu_custom_call.1} parent=0
    _
  %s5 = ssub.s32 1, %s3
  %s6 = scalar_select 0, %s5, %s3
  %8 = dma.hbm_to_smem %s0, 16, [#allocation5], [#allocation4]
  %9 = dma.done [#allocation4], 16
  %10 = sfence
  $region1: #{tpu_custom_call.1} parent=0
    #allocation6 [shape = 'u8[4096]{0}', space=vmem, size = 0x1000, scoped, tag = 'output window, operand 0, single buffered']
    #allocation7 [shape = 's32[1]{0}', space=sflag, size = 0x4, scoped, tag = 'scoped memory for tpu_custom_call.1']
    %11 = vsyncpa [#allocation7], 0
    %s12 = smul.u32 0, 8
    %s13 = sld [smem:[#allocation5 + %s12]]
    %s14 = smul.addr %s13, 16
    %s15 = scalar_lea.hbm %s1, %s14
    // Predicated region
    $region2: #{tpu_custom_call.1} parent=1 // pred_check
      _
    $region3: #{tpu_custom_call.1} parent=1 // pred_check_branch
      %17 = sbr.rel target = $region5
    $region4: #{tpu_custom_call.1} parent=1 // pred_region
      %18 = sst [smem:[#allocation10]] [#allocation9]
      %19 = sst [smem:[#allocation11]] [#allocation8]
    $region5: #{tpu_custom_call.1} parent=1 // pred_fallthru
      _
    %21 = shalt.err (0)
    %s23 = sshll.u32 [#allocation2], 4
    %s24 = int_to_ptr.vmem [resolvable:$true] %s23
    %26 = dma.hbm_to_vmem [thread:$0]  %s15, 16, %s24, [#allocation3]
    %s27 = sadd.s32 %s12, 1
    %s28 = sld [smem:[#allocation5 + %s27]]
    %s29 = smul.addr %s28, 16
    %s30 = scalar_lea.hbm %s1, %s29
    %s31 = scalar_lea.vmem [#allocation2], 1
    %s32 = scalar_lea.sflag [#allocation3], 1
    // Predicated region
    $region6: #{tpu_custom_call.1} parent=1 // pred_check
      _
    $region7: #{tpu_custom_call.1} parent=1 // pred_check_branch
      %34 = sbr.rel target = $region9
    $region8: #{tpu_custom_call.1} parent=1 // pred_region
      %35 = sst [smem:[#allocation10]] [#allocation13]
      %36 = sst [smem:[#allocation11]] [#allocation12]
    $region9: #{tpu_custom_call.1} parent=1 // pred_fallthru
      _
    %38 = shalt.err (0)
    %s40 = sshll.u32 %s31, 4
    %s41 = int_to_ptr.vmem [resolvable:$true] %s40
    %43 = dma.hbm_to_vmem [thread:$0]  %s30, 16, %s41, %s32
    %s44 = sadd.s32 %s12, 2
    %s45 = sld [smem:[#allocation5 + %s44]]
    %s46 = smul.addr %s45, 16
    %s47 = scalar_lea.hbm %s1, %s46
    %s48 = scalar_lea.vmem [#allocation2], 2
    %s49 = scalar_lea.sflag [#allocation3], 2
    // Predicated region
    $region10: #{tpu_custom_call.1} parent=1 // pred_check
      _
    $region11: #{tpu_custom_call.1} parent=1 // pred_check_branch
      %51 = sbr.rel target = $region13
    $region12: #{tpu_custom_call.1} parent=1 // pred_region
      %52 = sst [smem:[#allocation10]] [#allocation15]
      %53 = sst [smem:[#allocation11]] [#allocation14]
    $region13: #{tpu_custom_call.1} parent=1 // pred_fallthru
      _
    %55 = shalt.err (0)
    %s57 = sshll.u32 %s48, 4
    %s58 = int_to_ptr.vmem [resolvable:$true] %s57
    %60 = dma.hbm_to_vmem [thread:$0]  %s47, 16, %s58, %s49
    %s61 = sadd.s32 %s12, 3
    %s62 = sld [smem:[#allocation5 + %s61]]
    %s63 = smul.addr %s62, 16
    %s64 = scalar_lea.hbm %s1, %s63
    %s65 = scalar_lea.vmem [#allocation2], 3
    %s66 = scalar_lea.sflag [#allocation3], 3
    // Predicated region
    $region14: #{tpu_custom_call.1} parent=1 // pred_check
      _
    $region15: #{tpu_custom_call.1} parent=1 // pred_check_branch
      %68 = sbr.rel target = $region17
    $region16: #{tpu_custom_call.1} parent=1 // pred_region
      %69 = sst [smem:[#allocation10]] [#allocation17]
      %70 = sst [smem:[#allocation11]] [#allocation16]
    $region17: #{tpu_custom_call.1} parent=1 // pred_fallthru
      _
    %72 = shalt.err (0)
    %s74 = sshll.u32 %s65, 4
    %s75 = int_to_ptr.vmem [resolvable:$true] %s74
    %77 = dma.hbm_to_vmem [thread:$0]  %s64, 16, %s75, %s66
    %s78 = sadd.s32 %s12, 4
    %s79 = sld [smem:[#allocation5 + %s78]]
    %s80 = smul.addr %s79, 16
    %s81 = scalar_lea.hbm %s1, %s80
    %s82 = scalar_lea.vmem [#allocation2], 4
    %s83 = scalar_lea.sflag [#allocation3], 4
    // Predicated region
    $region18: #{tpu_custom_call.1} parent=1 // pred_check
      _
    $region19: #{tpu_custom_call.1} parent=1 // pred_check_branch
      %85 = sbr.rel target = $region21
    $region20: #{tpu_custom_call.1} parent=1 // pred_region
      %86 = sst [smem:[#allocation10]] [#allocation19]
      %87 = sst [smem:[#allocation11]] [#allocation18]
    $region21: #{tpu_custom_call.1} parent=1 // pred_fallthru
      _
    %89 = shalt.err (0)
    %s91 = sshll.u32 %s82, 4
    %s92 = int_to_ptr.vmem [resolvable:$true] %s91
    %94 = dma.hbm_to_vmem [thread:$0]  %s81, 16, %s92, %s83
    %s95 = sadd.s32 %s12, 5
    %s96 = sld [smem:[#allocation5 + %s95]]
    %s97 = smul.addr %s96, 16
    %s98 = scalar_lea.hbm %s1, %s97
    %s99 = scalar_lea.vmem [#allocation2], 5
    %s100 = scalar_lea.sflag [#allocation3], 5
    // Predicated region
    $region22: #{tpu_custom_call.1} parent=1 // pred_check
      _
    $region23: #{tpu_custom_call.1} parent=1 // pred_check_branch
      %102 = sbr.rel target = $region25
    $region24: #{tpu_custom_call.1} parent=1 // pred_region
      %103 = sst [smem:[#allocation10]] [#allocation21]
      %104 = sst [smem:[#allocation11]] [#allocation20]
    $region25: #{tpu_custom_call.1} parent=1 // pred_fallthru
      _
    %106 = shalt.err (0)
    %s108 = sshll.u32 %s99, 4
    %s109 = int_to_ptr.vmem [resolvable:$true] %s108
    %111 = dma.hbm_to_vmem [thread:$0]  %s98, 16, %s109, %s100
    %s112 = sadd.s32 %s12, 6
    %s113 = sld [smem:[#allocation5 + %s112]]
    %s114 = smul.addr %s113, 16
    %s115 = scalar_lea.hbm %s1, %s114
    %s116 = scalar_lea.vmem [#allocation2], 6
    %s117 = scalar_lea.sflag [#allocation3], 6
    // Predicated region
    $region26: #{tpu_custom_call.1} parent=1 // pred_check
      _
    $region27: #{tpu_custom_call.1} parent=1 // pred_check_branch
      %119 = sbr.rel target = $region29
    $region28: #{tpu_custom_call.1} parent=1 // pred_region
      %120 = sst [smem:[#allocation10]] [#allocation23]
      %121 = sst [smem:[#allocation11]] [#allocation22]
    $region29: #{tpu_custom_call.1} parent=1 // pred_fallthru
      _
    %123 = shalt.err (0)
    %s125 = sshll.u32 %s116, 4
    %s126 = int_to_ptr.vmem [resolvable:$true] %s125
    %128 = dma.hbm_to_vmem [thread:$0]  %s115, 16, %s126, %s117
    %s129 = sadd.s32 %s12, 7
    %s130 = sld [smem:[#allocation5 + %s129]]
    %s131 = smul.addr %s130, 16
    %s132 = scalar_lea.hbm %s1, %s131
    %s133 = scalar_lea.vmem [#allocation2], 7
    %s134 = scalar_lea.sflag [#allocation3], 7
    // Predicated region
    $region30: #{tpu_custom_call.1} parent=1 // pred_check
      _
    $region31: #{tpu_custom_call.1} parent=1 // pred_check_branch
      %136 = sbr.rel target = $region33
    $region32: #{tpu_custom_call.1} parent=1 // pred_region
      %137 = sst [smem:[#allocation10]] [#allocation25]
      %138 = sst [smem:[#allocation11]] [#allocation24]
    $region33: #{tpu_custom_call.1} parent=1 // pred_fallthru
      _
    %140 = shalt.err (0)
    %s142 = sshll.u32 %s133, 4
    %s143 = int_to_ptr.vmem [resolvable:$true] %s142
    %145 = dma.hbm_to_vmem [thread:$0]  %s132, 16, %s143, %s134
    %s146 = smul.u32 1, 1
    %s147 = sshll.u32 %s146, 4
    %148 = dma.done [#allocation3], %s147
    %s149 = sshll.u32 %s146, 4
    %150 = dma.done %s32, %s149
    %s151 = sshll.u32 %s146, 4
    %152 = dma.done %s49, %s151
    %s153 = sshll.u32 %s146, 4
    %154 = dma.done %s66, %s153
    %s155 = sshll.u32 %s146, 4
    %156 = dma.done %s83, %s155
    %s157 = sshll.u32 %s146, 4
    %158 = dma.done %s100, %s157
    %s159 = sshll.u32 %s146, 4
    %160 = dma.done %s117, %s159
    %s161 = sshll.u32 %s146, 4
    %162 = dma.done %s134, %s161
    %v163 = vld [vmem:[#allocation2] sm:$0xff]
    %164 = vst [vmem:[#allocation6] sm:$0xff] %v163
    // Predicated region
    $region34: #{tpu_custom_call.1} parent=1 // pred_check
      _
    $region35: #{tpu_custom_call.1} parent=1 // pred_check_branch
      %166 = sbr.rel (0) target = $region37
    $region36: #{tpu_custom_call.1} parent=1 // pred_region
      %s168 = ssub.s32 128, 128
      %169 = vsyncadd [#allocation7], %s168
      %s171 = sshll.u32 [#allocation6], 4
      %s172 = int_to_ptr.vmem [resolvable:$true] %s171
      %174 = dma.vmem_to_hbm [thread:$0]  %s172, 128, %s2, [#allocation7]
    $region37: #{tpu_custom_call.1} parent=1 // pred_fallthru
      _
    // Predicated region
    $region38: #{tpu_custom_call.1} parent=1 // pred_check
      _
    $region39: #{tpu_custom_call.1} parent=1 // pred_check_branch
      %176 = sbr.rel (0) target = $region41
    $region40: #{tpu_custom_call.1} parent=1 // pred_region
      %177 = dma.done [#allocation7], 128
    $region41: #{tpu_custom_call.1} parent=1 // pred_fallthru
      _
    %178 = vsyncpa [#allocation7], 1
  %179 = vsyncmov [#allocation3]
  %s180 = vpop.sfrf %179
  %p181 = scmp.eq.s32.totalorder %s180, 0
  %p182 = pneg %p181
  %184 = shalt.err (%p182)
  %s185 = scalar_lea.sflag [#allocation3], 1
  %186 = vsyncmov %s185
  %s187 = vpop.sfrf %186
  %p188 = scmp.eq.s32.totalorder %s187, 0
  %p189 = pneg %p188
  %191 = shalt.err (%p189)
  %s192 = scalar_lea.sflag [#allocation3], 2
  %193 = vsyncmov %s192
  %s194 = vpop.sfrf %193
  %p195 = scmp.eq.s32.totalorder %s194, 0
  %p196 = pneg %p195
  %198 = shalt.err (%p196)
  %s199 = scalar_lea.sflag [#allocation3], 3
  %200 = vsyncmov %s199
  %s201 = vpop.sfrf %200
  %p202 = scmp.eq.s32.totalorder %s201, 0
  %p203 = pneg %p202
  %205 = shalt.err (%p203)
  %s206 = scalar_lea.sflag [#allocation3], 4
  %207 = vsyncmov %s206
  %s208 = vpop.sfrf %207
  %p209 = scmp.eq.s32.totalorder %s208, 0
  %p210 = pneg %p209
  %212 = shalt.err (%p210)
  %s213 = scalar_lea.sflag [#allocation3], 5
  %214 = vsyncmov %s213
  %s215 = vpop.sfrf %214
  %p216 = scmp.eq.s32.totalorder %s215, 0
  %p217 = pneg %p216
  %219 = shalt.err (%p217)
  %s220 = scalar_lea.sflag [#allocation3], 6
  %221 = vsyncmov %s220
  %s222 = vpop.sfrf %221
  %p223 = scmp.eq.s32.totalorder %s222, 0
  %p224 = pneg %p223
  %226 = shalt.err (%p224)
  %s227 = scalar_lea.sflag [#allocation3], 7
  %228 = vsyncmov %s227
  %s229 = vpop.sfrf %228
  %p230 = scmp.eq.s32.totalorder %s229, 0
  %p231 = pneg %p230
  %233 = shalt.err (%p231)

</llo_original>
